<compile_context>
chip_gen: v6e
topology: v6e:2x2x1
jax: 0.10.0
libtpu: 0.0.40
codegen_flags: <defaults>
</compile_context>

<pallas_src>
import functools

import numpy as np
import jax
import jax.numpy as jnp
from jax.experimental import pallas as pl
from jax.experimental.pallas import tpu as pltpu


def _second_moment_kernel(a_ref, b_ref, x_ref, o_ref, *, n_terms):
    """One grid step: (block_b, D) input rows -> one lane-dense (block_b, D + D*D) slab."""
    x = x_ref[...]                                   # (block_b, D), f32 or bf16
    bb = x.shape[0]

    if n_terms == 3:
        # Exact f32 -> 3 x bf16 truncation split, done in VMEM (no HBM round trip).
        # hi/mid/lo carry disjoint 8-bit mantissa slices, so hi + mid + lo == x exactly and
        # the bf16 one-hot gather matmuls below reproduce x bit-exactly in the f32 accumulator.
        # (Edge cases: |x| < ~2^-110 underflows the bf16 lo term; Inf/NaN propagate as NaN.)
        mask = jnp.uint32(0xFFFF0000)
        hi = pltpu.bitcast(pltpu.bitcast(x, jnp.uint32) & mask, jnp.float32)
        r1 = x - hi
        mid = pltpu.bitcast(pltpu.bitcast(r1, jnp.uint32) & mask, jnp.float32)
        lo = r1 - mid
        terms = [hi, mid, lo]
    else:
        terms = [x]

    # Trailing ones column feeds the extra row of B so that q[:, :D] == 1.  This folds the
    # first-order "+1" bias into the gather matmul (no per-step iota / full-width VPU add).
    ones = jnp.ones((bb, 1), dtype=x.dtype)
    xs = jnp.concatenate(terms + [ones], axis=1).astype(jnp.bfloat16)  # (block_b, n_terms*D + 1)

    # One-hot gathers on the otherwise-idle MXU (bf16 x bf16 -> exact f32 accumulate):
    #   p[:, k] = x[:, k]          k <  D        q[:, k] = 1                k <  D
    #   p[:, k] = x[:, (k-D)//D]   k >= D        q[:, k] = x[:, (k-D) % D]  k >= D
    p = jnp.dot(xs, a_ref[...], preferred_element_type=jnp.float32)   # (block_b, W)
    q = jnp.dot(xs, b_ref[...], preferred_element_type=jnp.float32)   # (block_b, W)

    # Single full-width, lane-dense store of the whole output row slab.
    o_ref[...] = (p * q).astype(o_ref.dtype)


def _selector_matrices(d, n_terms, dtype):
    """One-hot gather matrices A, B of shape (n_terms*D + 1, D + D*D)."""
    w = d + d * d
    k = n_terms * d + 1
    a = np.zeros((k, w), dtype=np.float32)
    b = np.zeros((k, w), dtype=np.float32)
    cols = np.arange(d)
    for t in range(n_terms):
        rows = t * d + cols
        a[rows, cols] = 1.0                                   # p[:, j]       = x[:, j]
        for i in range(d):
            a[t * d + i, d + i * d: d + (i + 1) * d] = 1.0    # p[:, D+i*D+j] = x[:, i]
            b[rows, d + i * d + cols] = 1.0                   # q[:, D+i*D+j] = x[:, j]
    b[k - 1, :d] = 1.0                                        # ones row: q[:, :D] = 1
    return jnp.asarray(a, dtype), jnp.asarray(b, dtype)


def _per_row_vmem_bytes(d, w, itemsize):
    # double-buffered output block + p/q/product f32 temps + double-buffered input + slack
    return 2 * w * itemsize + 3 * w * 4 + 8 * d * itemsize + 64


def _pick_block_b(batch, d, w, itemsize):
    """Target ~2 MiB output slabs, capped by a conservative per-step VMEM footprint."""
    bb = (2 * 1024 * 1024) // (w * itemsize)
    bb = max(8, min(2048, (bb // 8) * 8))
    per_row = _per_row_vmem_bytes(d, w, itemsize)
    vmem_rows = max(8, (((24 * 1024 * 1024) // per_row) // 8) * 8)   # fits v7x 64 MiB/TC
    bb = min(bb, vmem_rows)
    # Keep >= 2 grid steps when the batch allows it, so the single "parallel" grid axis can
    # split across v7x's two TensorCores and the output writeback stays software-pipelined.
    half = max(8, (((batch + 1) // 2 + 7) // 8) * 8)
    bb = min(bb, half)
    if bb >= batch:
        return batch        # single full block: block shape == array shape is always legal
    return bb


def feature_net_second_moment(x, *, block_b=None):
    """x: (B, D) -> (B, D + D*D), matching the PyTorch forward (output dtype = input dtype)."""
    B, D = x.shape
    W = D + D * D

    if x.dtype == jnp.float32:
        n_terms = 3            # exact f32 via 3 bf16-rate gather terms (split fused in-kernel)
    elif x.dtype == jnp.bfloat16:
        n_terms = 1            # bf16 in / bf16 out: no split needed
    else:
        raise NotImplementedError(f"unsupported dtype {x.dtype}")
    K = n_terms * D + 1
    itemsize = jnp.dtype(x.dtype).itemsize

    if block_b is None:
        block_b = _pick_block_b(B, D, W, itemsize)
    block_b = min(block_b, B)
    if block_b != B and block_b % 8 != 0:
        raise ValueError("block_b must be a multiple of 8 (or equal to the batch)")

    a_mat, b_mat = _selector_matrices(D, n_terms, jnp.bfloat16)

    # Explicit scoped-VMEM limit: above every generation's default, below v7x's 64 MiB/TC.
    vmem_est = _per_row_vmem_bytes(D, W, itemsize) * block_b + 4 * K * W * 2 + (2 << 20)
    vmem_limit = int(min(48 * 1024 * 1024, max(32 * 1024 * 1024, vmem_est)))

    cost = pl.CostEstimate(
        flops=4 * B * K * W + B * W,
        transcendentals=0,
        bytes_accessed=B * D * itemsize + B * W * itemsize + 2 * K * W * 2,
    )

    kernel = functools.partial(_second_moment_kernel, n_terms=n_terms)

    return pl.pallas_call(
        kernel,
        out_shape=jax.ShapeDtypeStruct((B, W), x.dtype),
        grid_spec=pltpu.PrefetchScalarGridSpec(
            num_scalar_prefetch=0,
            grid=(pl.cdiv(B, block_b),),                       # partial last block clipped by Pallas
            in_specs=[
                pl.BlockSpec((K, W), lambda b: (0, 0)),        # gather matrix A (constant block)
                pl.BlockSpec((K, W), lambda b: (0, 0)),        # gather matrix B (constant block)
                pl.BlockSpec((block_b, D), lambda b: (b, 0)),  # raw input rows (split done in-kernel)
            ],
            out_specs=pl.BlockSpec((block_b, W), lambda b: (b, 0)),
        ),
        compiler_params=pltpu.CompilerParams(
            dimension_semantics=("parallel",),                 # batch axis: megacore / v7x TC split
            vmem_limit_bytes=vmem_limit,
        ),
        cost_estimate=cost,
    )(a_mat, b_mat, x)


if __name__ == "__main__":
    k0, k1, k2 = jax.random.split(jax.random.PRNGKey(0), 3)

    def ref_fn(x):
        outer = x[:, :, None] * x[:, None, :]                  # (B, D, D)
        return jnp.concatenate([x, outer.reshape(x.shape[0], -1)], axis=1)

    # f32, default tile selection (2-step pipelined grid on the batch axis).
    B, D = 128, 16
    x = jax.random.normal(k0, (B, D), dtype=jnp.float32)
    out = jax.block_until_ready(feature_net_second_moment(x))
    assert out.shape == (B, D + D * D)
    assert out.dtype == x.dtype
    assert jnp.allclose(out, ref_fn(x), atol=1e-6, rtol=1e-6)

    # Uneven batch: grid = cdiv(B, block_b), Pallas clips the partial last block.
    x2 = jax.random.normal(k1, (100, D), dtype=jnp.float32)
    out2 = jax.block_until_ready(feature_net_second_moment(x2, block_b=32))
    assert out2.shape == (100, D + D * D)
    assert jnp.allclose(out2, ref_fn(x2), atol=1e-6, rtol=1e-6)

    # bf16 path (no in-kernel split, bf16 writeback).
    x3 = jax.random.normal(k2, (64, D), dtype=jnp.bfloat16)
    out3 = jax.block_until_ready(feature_net_second_moment(x3))
    ref3 = ref_fn(x3.astype(jnp.float32)).astype(jnp.bfloat16)
    assert out3.dtype == jnp.bfloat16
    assert jnp.allclose(out3.astype(jnp.float32), ref3.astype(jnp.float32), atol=2e-2, rtol=2e-2)

    print("KERNEL_OK")
</pallas_src>

<mosaic_0001>
module attributes {stable_mosaic.version = 11 : i64} {
  func.func @_second_moment_kernel(%arg0: i32, %arg1: memref<49x272xbf16, #tpu.memory_space<vmem>>, %arg2: memref<49x272xbf16, #tpu.memory_space<vmem>>, %arg3: memref<64x16xf32, #tpu.memory_space<vmem>>, %arg4: memref<64x272xf32, #tpu.memory_space<vmem>>) attributes {dimension_semantics = [#tpu.dimension_semantics<parallel>], iteration_bounds = array<i64: 2>, scalar_prefetch = 0 : i64, scratch_operands = 0 : i64, tpu.core_type = #tpu.core_type<tc>, window_params = [{pipeline_mode = #tpu.pipeline_mode<synchronous>, transform_indices = @transform_0, window_bounds = array<i64: 49, 272>}, {pipeline_mode = #tpu.pipeline_mode<synchronous>, transform_indices = @transform_1, window_bounds = array<i64: 49, 272>}, {transform_indices = @transform_2, window_bounds = array<i64: 64, 16>}, {transform_indices = @transform_3, window_bounds = array<i64: 64, 272>}]} {
    %c0 = arith.constant 0 : index
    %c0_0 = arith.constant 0 : index
    %0 = vector.load %arg3[%c0, %c0_0] : memref<64x16xf32, #tpu.memory_space<vmem>>, vector<64x16xf32>
    %1 = tpu.bitcast %0 : vector<64x16xf32> -> vector<64x16xi32>
    %c-65536_i32 = arith.constant -65536 : i32
    %2 = vector.broadcast %c-65536_i32 : i32 to vector<64x16xi32>
    %3 = arith.andi %1, %2 : vector<64x16xi32>
    %4 = tpu.bitcast %3 : vector<64x16xi32> -> vector<64x16xf32>
    %5 = arith.subf %0, %4 : vector<64x16xf32>
    %6 = tpu.bitcast %5 : vector<64x16xf32> -> vector<64x16xi32>
    %c-65536_i32_1 = arith.constant -65536 : i32
    %7 = vector.broadcast %c-65536_i32_1 : i32 to vector<64x16xi32>
    %8 = arith.andi %6, %7 : vector<64x16xi32>
    %9 = tpu.bitcast %8 : vector<64x16xi32> -> vector<64x16xf32>
    %10 = arith.subf %5, %9 : vector<64x16xf32>
    %cst = arith.constant 1.000000e+00 : f32
    %11 = vector.broadcast %cst : f32 to vector<64x1xf32>
    %12 = tpu.concatenate %4, %9, %10, %11 in 1 : vector<64x16xf32>, vector<64x16xf32>, vector<64x16xf32>, vector<64x1xf32> -> vector<64x49xf32>
    %13 = arith.truncf %12 : vector<64x49xf32> to vector<64x49xbf16>
    %c0_2 = arith.constant 0 : index
    %c0_3 = arith.constant 0 : index
    %14 = vector.load %arg1[%c0_2, %c0_3] : memref<49x272xbf16, #tpu.memory_space<vmem>>, vector<49x272xbf16>
    %cst_4 = arith.constant dense<0.000000e+00> : vector<64x272xf32>
    %15 = tpu.matmul %13, %14, %cst_4 {dimension_numbers = #tpu.dot_dimension_numbers<[1], [0], [0], [1], [0, 0, 1, 1], [], []>} : vector<64x49xbf16>, vector<49x272xbf16>, vector<64x272xf32> -> vector<64x272xf32>
    %c0_5 = arith.constant 0 : index
    %c0_6 = arith.constant 0 : index
    %16 = vector.load %arg2[%c0_5, %c0_6] : memref<49x272xbf16, #tpu.memory_space<vmem>>, vector<49x272xbf16>
    %cst_7 = arith.constant dense<0.000000e+00> : vector<64x272xf32>
    %17 = tpu.matmul %13, %16, %cst_7 {dimension_numbers = #tpu.dot_dimension_numbers<[1], [0], [0], [1], [0, 0, 1, 1], [], []>} : vector<64x49xbf16>, vector<49x272xbf16>, vector<64x272xf32> -> vector<64x272xf32>
    %18 = arith.mulf %15, %17 : vector<64x272xf32>
    %c0_8 = arith.constant 0 : index
    %c0_9 = arith.constant 0 : index
    %19 = vector.load %arg4[%c0_8, %c0_9] : memref<64x272xf32, #tpu.memory_space<vmem>>, vector<64x272xf32>
    tpu.vector_store %arg4[%c0_8, %c0_9], %18 {strides = array<i32>} : memref<64x272xf32, #tpu.memory_space<vmem>>, vector<64x272xf32>,
    return
  }
  func.func @transform_0(%arg0: i32) -> (i32, i32) {
    %c0_i32 = arith.constant 0 : i32
    %c0_i32_0 = arith.constant 0 : i32
    %c0_i32_1 = arith.constant 0 : i32
    return %c0_i32, %c0_i32_0 : i32, i32
  }
  func.func @transform_1(%arg0: i32) -> (i32, i32) {
    %c0_i32 = arith.constant 0 : i32
    %c0_i32_0 = arith.constant 0 : i32
    %c0_i32_1 = arith.constant 0 : i32
    return %c0_i32, %c0_i32_0 : i32, i32
  }
  func.func @transform_2(%arg0: i32) -> (i32, i32) {
    %c0_i32 = arith.constant 0 : i32
    %c0_i32_0 = arith.constant 0 : i32
    return %arg0, %c0_i32 : i32, i32
  }
  func.func @transform_3(%arg0: i32) -> (i32, i32) {
    %c0_i32 = arith.constant 0 : i32
    %c0_i32_0 = arith.constant 0 : i32
    return %arg0, %c0_i32 : i32, i32
  }
}

</mosaic_0001>

<llo_original>
// kernel: tpu_custom_call.1
$region0: #{tpu_custom_call.1}
  #allocation0 [shape = 'u32[]', space=smem, size = 0x4, offset = 0x4, fixed_abs, tag = 'smem constant byte address 0x4 - core index']
  #allocation1 [shape = 'u32[144,128]{1,0:T(1,128)}', space=vmem, size = 0x12000, scoped, tag = 'internal scratch']
  %s0 = inlined_call_operand.vmem [shape: bf16[49,272], index: 0, kind: input, shape index: {}]
  %s1 = inlined_call_operand.hbm [shape: bf16[49,272], index: 1, kind: input, shape index: {}]
  %s2 = inlined_call_operand.vmem [shape: f32[128,16], index: 2, kind: input, shape index: {}]
  %s3 = inlined_call_operand.vmem [shape: f32[128,272], index: 3, kind: output, shape index: {}]
  %s4 = sld [smem:[#allocation0]]
  $region49: #{tpu_custom_call.1} parent=0
    _
  %s6 = ssub.s32 1, %s4
  %s7 = scalar_select 0, %s6, %s4
  $region1: #{tpu_custom_call.1} parent=0
    #allocation2 [shape = 'u8[43008]{0}', space=vmem, size = 0xa800, scoped, tag = 'input window, operand 1, single buffered']
    #allocation3 [shape = 's32[2]{0}', space=sflag, size = 0x8, scoped, tag = 'scoped memory for tpu_custom_call.1']
    %8 = vsyncpa [#allocation3], 0
    loop: start=0, step=1, limit=4
    $region2: #{tpu_custom_call.1} parent=1 // loop_pre_header
      _
    $region3: #{tpu_custom_call.1} parent=1 // loop_header
      %s10 = sphi 0, %s14
      %p11 = scmp.ge.s32.totalorder %s10, 4
      %s18 = sphi 0, %s18
      %s20 = sphi 0, %s18
      %s21 = sphi 0, %s20
      %s35 = sphi 0, %s21
      %s39 = sphi 0, %s39
      %s41 = sphi 0, %s39
      %s42 = sphi 0, %s41
      %s56 = sphi 0, %s42
      %s62 = sphi 0, %s64
      %s65 = sphi 0, %s62
      %s66 = sphi 0, %s65
      %s82 = sphi 0, %s66
      %s88 = sphi 0, %s90
      %s91 = sphi 0, %s88
      %s92 = sphi 0, %s91
      %s108 = sphi 0, %s92
    $region4: #{tpu_custom_call.1} parent=1 // loop_header_branch
      %13 = sbr.rel (%p11) target = $region8
    $region5: #{tpu_custom_call.1} parent=1 // loop_body
      %s15 = ssub.s32 %s10, 1
      %s16 = ssub.s32 %s10, 2
      %s17 = sadd.s32 %s10, 1
      %s19 = sadd.s32 %s18, 1
      %p22 = scmp.eq.s32.totalorder %s10, 1
      %p23 = scmp.ne.s32.totalorder %s18, %s20
      %p24 = scmp.eq.s32.totalorder %s10, 0
      %p25 = por %p23, %p24
      %p26 = scmp.ne.s32.totalorder %s18, %s20
      %p27 = scmp.eq.s32.totalorder %s15, 1
      %p28 = por %p26, %p27
      %p29 = scmp.ne.s32.totalorder %s20, %s21
      %p30 = scmp.eq.s32.totalorder %s15, 0
      %p31 = por %p29, %p30
      %p32 = scmp.ne.s32.totalorder %s20, %s21
      %p33 = scmp.eq.s32.totalorder %s16, 1
      %p34 = por %p32, %p33
      %p36 = scmp.ne.s32.totalorder %s21, %s35
      %p37 = scmp.eq.s32.totalorder %s16, 0
      %p38 = por %p36, %p37
      %s40 = sadd.s32 %s39, 1
      %p43 = scmp.eq.s32.totalorder %s10, 1
      %p44 = scmp.ne.s32.totalorder %s39, %s41
      %p45 = scmp.eq.s32.totalorder %s10, 0
      %p46 = por %p44, %p45
      %p47 = scmp.ne.s32.totalorder %s39, %s41
      %p48 = scmp.eq.s32.totalorder %s15, 1
      %p49 = por %p47, %p48
      %p50 = scmp.ne.s32.totalorder %s41, %s42
      %p51 = scmp.eq.s32.totalorder %s15, 0
      %p52 = por %p50, %p51
      %p53 = scmp.ne.s32.totalorder %s41, %s42
      %p54 = scmp.eq.s32.totalorder %s16, 1
      %p55 = por %p53, %p54
      %p57 = scmp.ne.s32.totalorder %s42, %s56
      %p58 = scmp.eq.s32.totalorder %s16, 0
      %p59 = por %p57, %p58
      %s60 = ssub.s32 %s10, %s17
      %p61 = scmp.eq.s32.totalorder %s60, 0
      %s63 = sadd.s32 %s62, 1
      %s64 = scalar_select %p61, %s62, %s63
      %p67 = pneg %p61
      %p68 = scmp.eq.s32.totalorder %s10, 1
      %p69 = por %p67, %p68
      %p70 = scmp.ne.s32.totalorder %s62, %s65
      %p71 = scmp.eq.s32.totalorder %s10, 0
      %p72 = por %p70, %p71
      %p73 = scmp.ne.s32.totalorder %s62, %s65
      %p74 = scmp.eq.s32.totalorder %s15, 1
      %p75 = por %p73, %p74
      %p76 = scmp.ne.s32.totalorder %s65, %s66
      %p77 = scmp.eq.s32.totalorder %s15, 0
      %p78 = por %p76, %p77
      %p79 = scmp.ne.s32.totalorder %s65, %s66
      %p80 = scmp.eq.s32.totalorder %s16, 1
      %p81 = por %p79, %p80
      %p83 = scmp.ne.s32.totalorder %s66, %s82
      %p84 = scmp.eq.s32.totalorder %s16, 0
      %p85 = por %p83, %p84
      %s86 = ssub.s32 %s10, %s17
      %p87 = scmp.eq.s32.totalorder %s86, 0
      %s89 = sadd.s32 %s88, 1
      %s90 = scalar_select %p87, %s88, %s89
      %p93 = pneg %p87
      %p94 = scmp.eq.s32.totalorder %s10, 1
      %p95 = por %p93, %p94
      %p96 = scmp.ne.s32.totalorder %s88, %s91
      %p97 = scmp.eq.s32.totalorder %s10, 0
      %p98 = por %p96, %p97
      %p99 = scmp.ne.s32.totalorder %s88, %s91
      %p100 = scmp.eq.s32.totalorder %s15, 1
      %p101 = por %p99, %p100
      %p102 = scmp.ne.s32.totalorder %s91, %s92
      %p103 = scmp.eq.s32.totalorder %s15, 0
      %p104 = por %p102, %p103
      %p105 = scmp.ne.s32.totalorder %s91, %s92
      %p106 = scmp.eq.s32.totalorder %s16, 1
      %p107 = por %p105, %p106
      %p109 = scmp.ne.s32.totalorder %s92, %s108
      %p110 = scmp.eq.s32.totalorder %s16, 0
      %p111 = por %p109, %p110
      %p112 = scmp.le.s32.totalorder 1, %s10
      %p113 = scmp.lt.s32.totalorder %s10, 3
      %p114 = pnand %p112, %p113
      %p115 = pneg %p114
      // Predicated region
      $region9: #{tpu_custom_call.1} parent=5 // pred_check
        _
      $region10: #{tpu_custom_call.1} parent=5 // pred_check_branch
        %117 = sbr.rel (%p114) target = $region12
      $region11: #{tpu_custom_call.1} parent=5 // pred_region
        %s118 = ssub.s32 %s10, 1
        // Predicated region
        $region13: #{tpu_custom_call.1} parent=11 // pred_check
          %p119 = pneg %p31
        $region14: #{tpu_custom_call.1} parent=11 // pred_check_branch
          %121 = sbr.rel (%p119) target = $region16
        $region15: #{tpu_custom_call.1} parent=11 // pred_region
          _
        $region16: #{tpu_custom_call.1} parent=11 // pred_fallthru
          _
        // Predicated region
        $region17: #{tpu_custom_call.1} parent=11 // pred_check
          %p122 = pneg %p52
        $region18: #{tpu_custom_call.1} parent=11 // pred_check_branch
          %124 = sbr.rel (%p122) target = $region20
        $region19: #{tpu_custom_call.1} parent=11 // pred_region
          %s126 = ssub.s32 1344, 1344
          %127 = vsyncadd [#allocation3], %s126
          %s128 = sshll.u32 [#allocation2], 4
          %s129 = int_to_ptr.vmem [resolvable:$true] %s128
          %134 = dma.hbm_to_vmem [thread:$0]  %s1, 1344, %s129, [#allocation3], 192, 192, 12
        $region20: #{tpu_custom_call.1} parent=11 // pred_fallthru
          _
      $region12: #{tpu_custom_call.1} parent=5 // pred_fallthru
        _
      %p135 = scmp.lt.s32.totalorder %s10, 2
      // Predicated region
      $region21: #{tpu_custom_call.1} parent=5 // pred_check
        %p136 = pneg %p135
      $region22: #{tpu_custom_call.1} parent=5 // pred_check_branch
        %138 = sbr.rel (%p136) target = $region24
      $region23: #{tpu_custom_call.1} parent=5 // pred_region
        // Predicated region
        $region25: #{tpu_custom_call.1} parent=23 // pred_check
          %p139 = pneg %p72
        $region26: #{tpu_custom_call.1} parent=23 // pred_check_branch
          %141 = sbr.rel (%p139) target = $region28
        $region27: #{tpu_custom_call.1} parent=23 // pred_region
          %s142 = smul.u32 8, %s10
          %p143 = scmp.lt.s32.totalorder %s142, 15
          %s144 = scalar_select %p143, %s142, 15
          %s145 = smul.addr %s144, 8
          %s146 = scalar_lea.vmem %s2, %s145
          %s147 = smul.u32 8, %s10
        $region28: #{tpu_custom_call.1} parent=23 // pred_fallthru
          _
      $region24: #{tpu_custom_call.1} parent=5 // pred_fallthru
        _
      %p148 = scmp.le.s32.totalorder 1, %s10
      %p149 = scmp.lt.s32.totalorder %s10, 3
      %p150 = pnand %p148, %p149
      %p151 = pneg %p150
      // Predicated region
      $region29: #{tpu_custom_call.1} parent=5 // pred_check
        _
      $region30: #{tpu_custom_call.1} parent=5 // pred_check_branch
        %153 = sbr.rel (%p150) target = $region32
      $region31: #{tpu_custom_call.1} parent=5 // pred_region
        %s154 = ssub.s32 %s10, 1
        // Predicated region
        $region33: #{tpu_custom_call.1} parent=31 // pred_check
          %p155 = pneg %p52
        $region34: #{tpu_custom_call.1} parent=31 // pred_check_branch
          %157 = sbr.rel (%p155) target = $region36
        $region35: #{tpu_custom_call.1} parent=31 // pred_region
          %158 = dma.done [#allocation3], 1344
        $region36: #{tpu_custom_call.1} parent=31 // pred_fallthru
          _
        %p159 = pneg %p31
        %p160 = pneg %p28
        %p161 = pneg %p52
        %p162 = pneg %p49
        %s163 = smul.u32 8, %s15
        %p164 = scmp.lt.s32.totalorder %s163, 15
        %s165 = scalar_select %p164, %s163, 15
        %s166 = smul.addr %s165, 8
        %s167 = scalar_lea.vmem %s2, %s166
        %p168 = pneg %p78
        %p169 = pneg %p75
        %p170 = pneg %p104
        %p171 = pneg %p101
        %s172 = smul.u32 8, %s15
        %p173 = scmp.lt.s32.totalorder %s172, 15
        %s174 = scalar_select %p173, %s172, 15
        %s175 = smul.addr %s174, 3
        %s176 = smul.addr %s175, 8
        %s177 = scalar_lea.vmem %s3, %s176
        %s178 = smul.u32 8, %s15
        %p179 = scmp.lt.s32.totalorder %s178, 15
        %s180 = scalar_select %p179, %s178, 15
        %s181 = smul.addr %s180, 8
        %s182 = scalar_lea.vmem %s2, %s181
        %s183 = smul.u32 8, %s15
        %s184 = smul.u32 8, %s15
        %p185 = scmp.lt.s32.totalorder %s184, 15
        %s186 = scalar_select %p185, %s184, 15
        %s187 = smul.addr %s186, 3
        %s188 = smul.addr %s187, 8
        %s189 = scalar_lea.vmem %s3, %s188
        %s190 = smul.u32 8, %s15
        %v192 = vld [vmem:[%s182] sm:$0xff]
        %v193 = vld [vmem:[%s182 + $0x8] sm:$0xff]
        %v194 = vld [vmem:[%s182 + $0x10] sm:$0xff]
        %v195 = vld [vmem:[%s182 + $0x18] sm:$0xff]
        %v196 = vld [vmem:[%s182 + $0x20] sm:$0xff]
        %v197 = vld [vmem:[%s182 + $0x28] sm:$0xff]
        %v198 = vld [vmem:[%s182 + $0x30] sm:$0xff]
        %v199 = vld [vmem:[%s182 + $0x38] sm:$0xff]
        %v208 = vand.u32 %v192, 4294901760
        %v209 = vand.u32 %v193, 4294901760
        %v210 = vand.u32 %v194, 4294901760
        %v211 = vand.u32 %v195, 4294901760
        %v212 = vand.u32 %v196, 4294901760
        %v213 = vand.u32 %v197, 4294901760
        %v214 = vand.u32 %v198, 4294901760
        %v215 = vand.u32 %v199, 4294901760
        %v224 = vsub.f32 %v192, %v208
        %v225 = vsub.f32 %v193, %v209
        %v226 = vsub.f32 %v194, %v210
        %v227 = vsub.f32 %v195, %v211
        %v228 = vsub.f32 %v196, %v212
        %v229 = vsub.f32 %v197, %v213
        %v230 = vsub.f32 %v198, %v214
        %v231 = vsub.f32 %v199, %v215
        %v240 = vand.u32 %v224, 4294901760
        %v241 = vand.u32 %v225, 4294901760
        %v242 = vand.u32 %v226, 4294901760
        %v243 = vand.u32 %v227, 4294901760
        %v244 = vand.u32 %v228, 4294901760
        %v245 = vand.u32 %v229, 4294901760
        %v246 = vand.u32 %v230, 4294901760
        %v247 = vand.u32 %v231, 4294901760
        %v256 = vsub.f32 %v224, %v240
        %v257 = vsub.f32 %v225, %v241
        %v258 = vsub.f32 %v226, %v242
        %v259 = vsub.f32 %v227, %v243
        %v260 = vsub.f32 %v228, %v244
        %v261 = vsub.f32 %v229, %v245
        %v262 = vsub.f32 %v230, %v246
        %v263 = vsub.f32 %v231, %v247
        %264 = vrot.lane.b32.xlu0 %v240, 16
        %v265 = vpop.permute.xlu0 %264
        %266 = vrot.lane.b32.xlu0 %v241, 16
        %v267 = vpop.permute.xlu0 %266
        %268 = vrot.lane.b32.xlu0 %v242, 16
        %v269 = vpop.permute.xlu0 %268
        %270 = vrot.lane.b32.xlu0 %v243, 16
        %v271 = vpop.permute.xlu0 %270
        %272 = vrot.lane.b32.xlu0 %v244, 16
        %v273 = vpop.permute.xlu0 %272
        %274 = vrot.lane.b32.xlu0 %v245, 16
        %v275 = vpop.permute.xlu0 %274
        %276 = vrot.lane.b32.xlu0 %v246, 16
        %v277 = vpop.permute.xlu0 %276
        %278 = vrot.lane.b32.xlu0 %v247, 16
        %v279 = vpop.permute.xlu0 %278
        %296 = vrot.lane.b32.xlu0 %v256, 32
        %v297 = vpop.permute.xlu0 %296
        %298 = vrot.lane.b32.xlu0 %v257, 32
        %v299 = vpop.permute.xlu0 %298
        %300 = vrot.lane.b32.xlu0 %v258, 32
        %v301 = vpop.permute.xlu0 %300
        %302 = vrot.lane.b32.xlu0 %v259, 32
        %v303 = vpop.permute.xlu0 %302
        %304 = vrot.lane.b32.xlu0 %v260, 32
        %v305 = vpop.permute.xlu0 %304
        %306 = vrot.lane.b32.xlu0 %v261, 32
        %v307 = vpop.permute.xlu0 %306
        %308 = vrot.lane.b32.xlu0 %v262, 32
        %v309 = vpop.permute.xlu0 %308
        %310 = vrot.lane.b32.xlu0 %v263, 32
        %v311 = vpop.permute.xlu0 %310
        %vm320 = vcmask 130048
        %v321 = vsel %vm320, %v208, %v265
        %v322 = vsel %vm320, %v209, %v267
        %v323 = vsel %vm320, %v210, %v269
        %v324 = vsel %vm320, %v211, %v271
        %v325 = vsel %vm320, %v212, %v273
        %v326 = vsel %vm320, %v213, %v275
        %v327 = vsel %vm320, %v214, %v277
        %v328 = vsel %vm320, %v215, %v279
        %vm329 = vcmask 261120
        %v330 = vsel %vm329, %v321, %v297
        %v331 = vsel %vm329, %v322, %v299
        %v332 = vsel %vm329, %v323, %v301
        %v333 = vsel %vm329, %v324, %v303
        %v334 = vsel %vm329, %v325, %v305
        %v335 = vsel %vm329, %v326, %v307
        %v336 = vsel %vm329, %v327, %v309
        %v337 = vsel %vm329, %v328, %v311
        %vm338 = vcmask 392192
        %v339 = vsel %vm338, %v330, 1.0
        %v340 = vsel %vm338, %v331, 1.0
        %v341 = vsel %vm338, %v332, 1.0
        %v342 = vsel %vm338, %v333, 1.0
        %v343 = vsel %vm338, %v334, 1.0
        %v344 = vsel %vm338, %v335, 1.0
        %v345 = vsel %vm338, %v336, 1.0
        %v346 = vsel %vm338, %v337, 1.0
        %v347 = vpack.c.bf16 %v340, %v339
        %v348 = vpack.c.bf16 %v342, %v341
        %v349 = vpack.c.bf16 %v344, %v343
        %v350 = vpack.c.bf16 %v346, %v345
        %v351 = vld [vmem:[%s0] sm:$0xff]
        %v352 = vld [vmem:[%s0 + $0x8] sm:$0xf]
        %v353 = vld [vmem:[%s0 + $0xc] sm:$0xff]
        %v354 = vld [vmem:[%s0 + $0x14] sm:$0xf]
        %v355 = vld [vmem:[%s0 + $0x18] sm:$0xff]
        %v356 = vld [vmem:[%s0 + $0x20] sm:$0xf]
        %v357 = vld [vmem:[%s0 + $0x24] sm:$0xff]
        %v358 = vld [vmem:[%s0 + $0x2c] sm:$0xf]
        %v359 = vld [vmem:[%s0 + $0x30] sm:$0xff]
        %v360 = vld [vmem:[%s0 + $0x38] sm:$0xf]
        %v361 = vld [vmem:[%s0 + $0x3c] sm:$0xff]
        %v362 = vld [vmem:[%s0 + $0x44] sm:$0xf]
        %v363 = vld [vmem:[%s0 + $0x48] sm:$0x11]
        %v364 = vld [vmem:[%s0 + $0x50] sm:$0x1]
        %v379 = vunpack.c.l.b16 %v351
        %v380 = vunpack.c.h.b16 %v351
        %v381 = vunpack.c.l.b16 %v352
        %v382 = vunpack.c.l.b16 %v353
        %v383 = vunpack.c.h.b16 %v353
        %v384 = vunpack.c.l.b16 %v354
        %v385 = vunpack.c.l.b16 %v355
        %v386 = vunpack.c.h.b16 %v355
        %v387 = vunpack.c.l.b16 %v356
        %v388 = vunpack.c.l.b16 %v357
        %v389 = vunpack.c.h.b16 %v357
        %v390 = vunpack.c.l.b16 %v358
        %v391 = vunpack.c.l.b16 %v359
        %v392 = vunpack.c.h.b16 %v359
        %v393 = vunpack.c.l.b16 %v360
        %v394 = vunpack.c.l.b16 %v361
        %v395 = vunpack.c.h.b16 %v361
        %v396 = vunpack.c.l.b16 %v362
        %v397 = vunpack.c.l.b16 %v363
        %v398 = vunpack.c.h.b16 %v363
        %v399 = vunpack.c.l.b16 %v364
        %v400 = vpack.c.b16 %v382, %v379
        %v401 = vpack.c.b16 %v383, %v380
        %v402 = vpack.c.b16 %v384, %v381
        %v403 = vpack.c.b16 %v388, %v385
        %v404 = vpack.c.b16 %v389, %v386
        %v405 = vpack.c.b16 %v390, %v387
        %v406 = vpack.c.b16 %v394, %v391
        %v407 = vpack.c.b16 %v395, %v392
        %v408 = vpack.c.b16 %v396, %v393
        %v409 = vpack.c.b16 %v397, %v397
        %v410 = vpack.c.b16 %v398, %v398
        %v411 = vpack.c.b16 %v399, %v399
        %vm421 = vcmask 400384
        %v423 = vsel %vm421, %v347, 0
        %v426 = vsel %vm421, %v348, 0
        %v429 = vsel %vm421, %v349, 0
        %v432 = vsel %vm421, %v350, 0
        %vm434 = vcmask 1040384
        %v435 = vsel 0, 4294967295, 65535
        %v436 = vsel %vm434, %v435, 0
        %v438 = vand.u32 %v409, %v436
        %v441 = vand.u32 %v410, %v436
        %v444 = vand.u32 %v411, %v436
        %446 = vmatprep.subr.bf16.mxu0 0
        %447 = vmatpush1.bf16.msra.mxu0 0
        %448 = vmatprep.subr.bf16.mxu0 0
        %449 = vmatpush1.bf16.msra.mxu0 0
        %450 = vmatprep.subr.bf16.mxu0 0
        %451 = vmatpush1.bf16.msra.mxu0 0
        %452 = vmatprep.subr.bf16.mxu0 0
        %453 = vmatpush1.bf16.msra.mxu0 0
        %454 = vmatprep.subr.bf16.mxu0 %v441
        %455 = vmatpush1.bf16.msra.mxu0 %v438
        %456 = vmatprep.subr.bf16.mxu0 %v407
        %457 = vmatpush1.bf16.msra.mxu0 %v406
        %458 = vmatprep.subr.bf16.mxu0 %v404
        %459 = vmatpush1.bf16.msra.mxu0 %v403
        %460 = vmatprep.subr.bf16.mxu0 %v401
        %461 = vmatpush1.bf16.msra.mxu0 %v400
        %462 = vmatprep.subr.bf16.mxu0 0
        %463 = vmatpush2.bf16.msra.mxu0 0
        %464 = vmatprep.subr.bf16.mxu0 0
        %465 = vmatpush2.bf16.msra.mxu0 0
        %466 = vmatprep.subr.bf16.mxu0 0
        %467 = vmatpush2.bf16.msra.mxu0 0
        %468 = vmatprep.subr.bf16.mxu0 0
        %469 = vmatpush2.bf16.msra.mxu0 0
        %470 = vmatprep.subr.bf16.mxu0 0
        %471 = vmatpush2.bf16.msra.mxu0 0
        %472 = vmatprep.subr.bf16.mxu0 0
        %473 = vmatpush2.bf16.msra.mxu0 0
        %474 = vmatprep.subr.bf16.mxu0 0
        %475 = vmatpush2.bf16.msra.mxu0 0
        %476 = vmatprep.subr.bf16.mxu0 0
        %477 = vmatpush2.bf16.msra.mxu0 0
        %478 = vmatprep.mubr.bf16.mxu0 0
        %479 = vmatmul.mubr.bf16.gmra.mxu0 %v423
        %v480 = vpop.f32.mrf.mxu0
        %v481 = vadd.f32 0.0, %v480
        %v482 = vpop.f32.mrf.mxu0
        %v483 = vadd.f32 0.0, %v482
        %v484 = vpop.f32.mrf.mxu0
        %v485 = vadd.f32 0.0, %v484
        %v486 = vpop.f32.mrf.mxu0
        %v487 = vadd.f32 0.0, %v486
        %488 = vmatprep.mubr.bf16.mxu0 0
        %489 = vmatmul.mubr.bf16.gmra.mxu0 %v426
        %v490 = vpop.f32.mrf.mxu0
        %v491 = vadd.f32 0.0, %v490
        %v492 = vpop.f32.mrf.mxu0
        %v493 = vadd.f32 0.0, %v492
        %v494 = vpop.f32.mrf.mxu0
        %v495 = vadd.f32 0.0, %v494
        %v496 = vpop.f32.mrf.mxu0
        %v497 = vadd.f32 0.0, %v496
        %498 = vmatprep.mubr.bf16.mxu0 0
        %499 = vmatmul.mubr.bf16.gmra.mxu0 %v429
        %v500 = vpop.f32.mrf.mxu0
        %v501 = vadd.f32 0.0, %v500
        %v502 = vpop.f32.mrf.mxu0
        %v503 = vadd.f32 0.0, %v502
        %v504 = vpop.f32.mrf.mxu0
        %v505 = vadd.f32 0.0, %v504
        %v506 = vpop.f32.mrf.mxu0
        %v507 = vadd.f32 0.0, %v506
        %508 = vmatprep.mubr.bf16.mxu0 0
        %509 = vmatmul.mubr.bf16.gmra.mxu0 %v432
        %v510 = vpop.f32.mrf.mxu0
        %v511 = vadd.f32 0.0, %v510
        %v512 = vpop.f32.mrf.mxu0
        %v513 = vadd.f32 0.0, %v512
        %v514 = vpop.f32.mrf.mxu0
        %v515 = vadd.f32 0.0, %v514
        %v516 = vpop.f32.mrf.mxu0
        %v517 = vadd.f32 0.0, %v516
        %518 = vdwg.mxu0
        %519 = vmatprep.subr.bf16.mxu0 0
        %520 = vmatpush1.bf16.msra.mxu0 0
        %521 = vmatprep.subr.bf16.mxu0 0
        %522 = vmatpush1.bf16.msra.mxu0 0
        %523 = vmatprep.subr.bf16.mxu0 0
        %524 = vmatpush1.bf16.msra.mxu0 0
        %525 = vmatprep.subr.bf16.mxu0 0
        %526 = vmatpush1.bf16.msra.mxu0 0
        %527 = vmatprep.subr.bf16.mxu0 0
        %528 = vmatpush1.bf16.msra.mxu0 %v444
        %529 = vmatprep.subr.bf16.mxu0 0
        %530 = vmatpush1.bf16.msra.mxu0 %v408
        %531 = vmatprep.subr.bf16.mxu0 0
        %532 = vmatpush1.bf16.msra.mxu0 %v405
        %533 = vmatprep.subr.bf16.mxu0 0
        %534 = vmatpush1.bf16.msra.mxu0 %v402
        %535 = vmatprep.subr.bf16.mxu0 0
        %536 = vmatpush2.bf16.msra.mxu0 0
        %537 = vmatprep.subr.bf16.mxu0 0
        %538 = vmatpush2.bf16.msra.mxu0 0
        %539 = vmatprep.subr.bf16.mxu0 0
        %540 = vmatpush2.bf16.msra.mxu0 0
        %541 = vmatprep.subr.bf16.mxu0 0
        %542 = vmatpush2.bf16.msra.mxu0 0
        %543 = vmatprep.subr.bf16.mxu0 0
        %544 = vmatpush2.bf16.msra.mxu0 0
        %545 = vmatprep.subr.bf16.mxu0 0
        %546 = vmatpush2.bf16.msra.mxu0 0
        %547 = vmatprep.subr.bf16.mxu0 0
        %548 = vmatpush2.bf16.msra.mxu0 0
        %549 = vmatprep.subr.bf16.mxu0 0
        %550 = vmatpush2.bf16.msra.mxu0 0
        %551 = vmatprep.mubr.bf16.mxu0 0
        %552 = vmatmul.mubr.bf16.gmra.mxu0 %v423
        %v553 = vpop.f32.mrf.mxu0
        %v554 = vadd.f32 0.0, %v553
        %v555 = vpop.f32.mrf.mxu0
        %v556 = vpop.f32.mrf.mxu0
        %v557 = vadd.f32 0.0, %v556
        %v558 = vpop.f32.mrf.mxu0
        %559 = vmatprep.mubr.bf16.mxu0 0
        %560 = vmatmul.mubr.bf16.gmra.mxu0 %v426
        %v561 = vpop.f32.mrf.mxu0
        %v562 = vadd.f32 0.0, %v561
        %v563 = vpop.f32.mrf.mxu0
        %v564 = vpop.f32.mrf.mxu0
        %v565 = vadd.f32 0.0, %v564
        %v566 = vpop.f32.mrf.mxu0
        %567 = vmatprep.mubr.bf16.mxu0 0
        %568 = vmatmul.mubr.bf16.gmra.mxu0 %v429
        %v569 = vpop.f32.mrf.mxu0
        %v570 = vadd.f32 0.0, %v569
        %v571 = vpop.f32.mrf.mxu0
        %v572 = vpop.f32.mrf.mxu0
        %v573 = vadd.f32 0.0, %v572
        %v574 = vpop.f32.mrf.mxu0
        %575 = vmatprep.mubr.bf16.mxu0 0
        %576 = vmatmul.mubr.bf16.gmra.mxu0 %v432
        %v577 = vpop.f32.mrf.mxu0
        %v578 = vadd.f32 0.0, %v577
        %v579 = vpop.f32.mrf.mxu0
        %v580 = vpop.f32.mrf.mxu0
        %v581 = vadd.f32 0.0, %v580
        %v582 = vpop.f32.mrf.mxu0
        %583 = vdwg.mxu0
        %v584 = vld [vmem:[#allocation2] sm:$0xff]
        %v585 = vld [vmem:[#allocation2 + $0x8] sm:$0xf]
        %v586 = vld [vmem:[#allocation2 + $0xc] sm:$0xff]
        %v587 = vld [vmem:[#allocation2 + $0x14] sm:$0xf]
        %v588 = vld [vmem:[#allocation2 + $0x18] sm:$0xff]
        %v589 = vld [vmem:[#allocation2 + $0x20] sm:$0xf]
        %v590 = vld [vmem:[#allocation2 + $0x24] sm:$0xff]
        %v591 = vld [vmem:[#allocation2 + $0x2c] sm:$0xf]
        %v592 = vld [vmem:[#allocation2 + $0x30] sm:$0xff]
        %v593 = vld [vmem:[#allocation2 + $0x38] sm:$0xf]
        %v594 = vld [vmem:[#allocation2 + $0x3c] sm:$0xff]
        %v595 = vld [vmem:[#allocation2 + $0x44] sm:$0xf]
        %v596 = vld [vmem:[#allocation2 + $0x48] sm:$0x11]
        %v597 = vld [vmem:[#allocation2 + $0x50] sm:$0x1]
        %v612 = vunpack.c.l.b16 %v584
        %v613 = vunpack.c.h.b16 %v584
        %v614 = vunpack.c.l.b16 %v585
        %v615 = vunpack.c.l.b16 %v586
        %v616 = vunpack.c.h.b16 %v586
        %v617 = vunpack.c.l.b16 %v587
        %v618 = vunpack.c.l.b16 %v588
        %v619 = vunpack.c.h.b16 %v588
        %v620 = vunpack.c.l.b16 %v589
        %v621 = vunpack.c.l.b16 %v590
        %v622 = vunpack.c.h.b16 %v590
        %v623 = vunpack.c.l.b16 %v591
        %v624 = vunpack.c.l.b16 %v592
        %v625 = vunpack.c.h.b16 %v592
        %v626 = vunpack.c.l.b16 %v593
        %v627 = vunpack.c.l.b16 %v594
        %v628 = vunpack.c.h.b16 %v594
        %v629 = vunpack.c.l.b16 %v595
        %v630 = vunpack.c.l.b16 %v596
        %v631 = vunpack.c.h.b16 %v596
        %v632 = vunpack.c.l.b16 %v597
        %v633 = vpack.c.b16 %v615, %v612
        %v634 = vpack.c.b16 %v616, %v613
        %v635 = vpack.c.b16 %v617, %v614
        %v636 = vpack.c.b16 %v621, %v618
        %v637 = vpack.c.b16 %v622, %v619
        %v638 = vpack.c.b16 %v623, %v620
        %v639 = vpack.c.b16 %v627, %v624
        %v640 = vpack.c.b16 %v628, %v625
        %v641 = vpack.c.b16 %v629, %v626
        %v642 = vpack.c.b16 %v630, %v630
        %v643 = vpack.c.b16 %v631, %v631
        %v644 = vpack.c.b16 %v632, %v632
        %v655 = vand.u32 %v642, %v436
        %v658 = vand.u32 %v643, %v436
        %v661 = vand.u32 %v644, %v436
        %663 = vmatprep.subr.bf16.mxu0 0
        %664 = vmatpush1.bf16.msra.mxu0 0
        %665 = vmatprep.subr.bf16.mxu0 0
        %666 = vmatpush1.bf16.msra.mxu0 0
        %667 = vmatprep.subr.bf16.mxu0 0
        %668 = vmatpush1.bf16.msra.mxu0 0
        %669 = vmatprep.subr.bf16.mxu0 0
        %670 = vmatpush1.bf16.msra.mxu0 0
        %671 = vmatprep.subr.bf16.mxu0 %v658
        %672 = vmatpush1.bf16.msra.mxu0 %v655
        %673 = vmatprep.subr.bf16.mxu0 %v640
        %674 = vmatpush1.bf16.msra.mxu0 %v639
        %675 = vmatprep.subr.bf16.mxu0 %v637
        %676 = vmatpush1.bf16.msra.mxu0 %v636
        %677 = vmatprep.subr.bf16.mxu0 %v634
        %678 = vmatpush1.bf16.msra.mxu0 %v633
        %679 = vmatprep.subr.bf16.mxu0 0
        %680 = vmatpush2.bf16.msra.mxu0 0
        %681 = vmatprep.subr.bf16.mxu0 0
        %682 = vmatpush2.bf16.msra.mxu0 0
        %683 = vmatprep.subr.bf16.mxu0 0
        %684 = vmatpush2.bf16.msra.mxu0 0
        %685 = vmatprep.subr.bf16.mxu0 0
        %686 = vmatpush2.bf16.msra.mxu0 0
        %687 = vmatprep.subr.bf16.mxu0 0
        %688 = vmatpush2.bf16.msra.mxu0 0
        %689 = vmatprep.subr.bf16.mxu0 0
        %690 = vmatpush2.bf16.msra.mxu0 0
        %691 = vmatprep.subr.bf16.mxu0 0
        %692 = vmatpush2.bf16.msra.mxu0 0
        %693 = vmatprep.subr.bf16.mxu0 0
        %694 = vmatpush2.bf16.msra.mxu0 0
        %695 = vmatprep.mubr.bf16.mxu0 0
        %696 = vmatmul.mubr.bf16.gmra.mxu0 %v423
        %v697 = vpop.f32.mrf.mxu0
        %v698 = vadd.f32 0.0, %v697
        %v699 = vpop.f32.mrf.mxu0
        %v700 = vadd.f32 0.0, %v699
        %v701 = vpop.f32.mrf.mxu0
        %v702 = vadd.f32 0.0, %v701
        %v703 = vpop.f32.mrf.mxu0
        %v704 = vadd.f32 0.0, %v703
        %705 = vmatprep.mubr.bf16.mxu0 0
        %706 = vmatmul.mubr.bf16.gmra.mxu0 %v426
        %v707 = vpop.f32.mrf.mxu0
        %v708 = vadd.f32 0.0, %v707
        %v709 = vpop.f32.mrf.mxu0
        %v710 = vadd.f32 0.0, %v709
        %v711 = vpop.f32.mrf.mxu0
        %v712 = vadd.f32 0.0, %v711
        %v713 = vpop.f32.mrf.mxu0
        %v714 = vadd.f32 0.0, %v713
        %715 = vmatprep.mubr.bf16.mxu0 0
        %716 = vmatmul.mubr.bf16.gmra.mxu0 %v429
        %v717 = vpop.f32.mrf.mxu0
        %v718 = vadd.f32 0.0, %v717
        %v719 = vpop.f32.mrf.mxu0
        %v720 = vadd.f32 0.0, %v719
        %v721 = vpop.f32.mrf.mxu0
        %v722 = vadd.f32 0.0, %v721
        %v723 = vpop.f32.mrf.mxu0
        %v724 = vadd.f32 0.0, %v723
        %725 = vmatprep.mubr.bf16.mxu0 0
        %726 = vmatmul.mubr.bf16.gmra.mxu0 %v432
        %v727 = vpop.f32.mrf.mxu0
        %v728 = vadd.f32 0.0, %v727
        %v729 = vpop.f32.mrf.mxu0
        %v730 = vadd.f32 0.0, %v729
        %v731 = vpop.f32.mrf.mxu0
        %v732 = vadd.f32 0.0, %v731
        %v733 = vpop.f32.mrf.mxu0
        %v734 = vadd.f32 0.0, %v733
        %735 = vdwg.mxu0
        %736 = vmatprep.subr.bf16.mxu0 0
        %737 = vmatpush1.bf16.msra.mxu0 0
        %738 = vmatprep.subr.bf16.mxu0 0
        %739 = vmatpush1.bf16.msra.mxu0 0
        %740 = vmatprep.subr.bf16.mxu0 0
        %741 = vmatpush1.bf16.msra.mxu0 0
        %742 = vmatprep.subr.bf16.mxu0 0
        %743 = vmatpush1.bf16.msra.mxu0 0
        %744 = vmatprep.subr.bf16.mxu0 0
        %745 = vmatpush1.bf16.msra.mxu0 %v661
        %746 = vmatprep.subr.bf16.mxu0 0
        %747 = vmatpush1.bf16.msra.mxu0 %v641
        %748 = vmatprep.subr.bf16.mxu0 0
        %749 = vmatpush1.bf16.msra.mxu0 %v638
        %750 = vmatprep.subr.bf16.mxu0 0
        %751 = vmatpush1.bf16.msra.mxu0 %v635
        %752 = vmatprep.subr.bf16.mxu0 0
        %753 = vmatpush2.bf16.msra.mxu0 0
        %754 = vmatprep.subr.bf16.mxu0 0
        %755 = vmatpush2.bf16.msra.mxu0 0
        %756 = vmatprep.subr.bf16.mxu0 0
        %757 = vmatpush2.bf16.msra.mxu0 0
        %758 = vmatprep.subr.bf16.mxu0 0
        %759 = vmatpush2.bf16.msra.mxu0 0
        %760 = vmatprep.subr.bf16.mxu0 0
        %761 = vmatpush2.bf16.msra.mxu0 0
        %762 = vmatprep.subr.bf16.mxu0 0
        %763 = vmatpush2.bf16.msra.mxu0 0
        %764 = vmatprep.subr.bf16.mxu0 0
        %765 = vmatpush2.bf16.msra.mxu0 0
        %766 = vmatprep.subr.bf16.mxu0 0
        %767 = vmatpush2.bf16.msra.mxu0 0
        %768 = vmatprep.mubr.bf16.mxu0 0
        %769 = vmatmul.mubr.bf16.gmra.mxu0 %v423
        %v770 = vpop.f32.mrf.mxu0
        %v771 = vadd.f32 0.0, %v770
        %v772 = vpop.f32.mrf.mxu0
        %v773 = vpop.f32.mrf.mxu0
        %v774 = vadd.f32 0.0, %v773
        %v775 = vpop.f32.mrf.mxu0
        %776 = vmatprep.mubr.bf16.mxu0 0
        %777 = vmatmul.mubr.bf16.gmra.mxu0 %v426
        %v778 = vpop.f32.mrf.mxu0
        %v779 = vadd.f32 0.0, %v778
        %v780 = vpop.f32.mrf.mxu0
        %v781 = vpop.f32.mrf.mxu0
        %v782 = vadd.f32 0.0, %v781
        %v783 = vpop.f32.mrf.mxu0
        %784 = vmatprep.mubr.bf16.mxu0 0
        %785 = vmatmul.mubr.bf16.gmra.mxu0 %v429
        %v786 = vpop.f32.mrf.mxu0
        %v787 = vadd.f32 0.0, %v786
        %v788 = vpop.f32.mrf.mxu0
        %v789 = vpop.f32.mrf.mxu0
        %v790 = vadd.f32 0.0, %v789
        %v791 = vpop.f32.mrf.mxu0
        %792 = vmatprep.mubr.bf16.mxu0 0
        %793 = vmatmul.mubr.bf16.gmra.mxu0 %v432
        %v794 = vpop.f32.mrf.mxu0
        %v795 = vadd.f32 0.0, %v794
        %v796 = vpop.f32.mrf.mxu0
        %v797 = vpop.f32.mrf.mxu0
        %v798 = vadd.f32 0.0, %v797
        %v799 = vpop.f32.mrf.mxu0
        %800 = vdwg.mxu0
        %v801 = vmul.f32 %v481, %v698
        %v802 = vmul.f32 %v483, %v700
        %v803 = vmul.f32 %v554, %v771
        %v804 = vmul.f32 %v485, %v702
        %v805 = vmul.f32 %v487, %v704
        %v806 = vmul.f32 %v557, %v774
        %v807 = vmul.f32 %v491, %v708
        %v808 = vmul.f32 %v493, %v710
        %v809 = vmul.f32 %v562, %v779
        %v810 = vmul.f32 %v495, %v712
        %v811 = vmul.f32 %v497, %v714
        %v812 = vmul.f32 %v565, %v782
        %v813 = vmul.f32 %v501, %v718
        %v814 = vmul.f32 %v503, %v720
        %v815 = vmul.f32 %v570, %v787
        %v816 = vmul.f32 %v505, %v722
        %v817 = vmul.f32 %v507, %v724
        %v818 = vmul.f32 %v573, %v790
        %v819 = vmul.f32 %v511, %v728
        %v820 = vmul.f32 %v513, %v730
        %v821 = vmul.f32 %v578, %v795
        %v822 = vmul.f32 %v515, %v732
        %v823 = vmul.f32 %v517, %v734
        %v824 = vmul.f32 %v581, %v798
        %825 = vst [vmem:[%s189] sm:$0xff] %v801
        %826 = vst [vmem:[%s189 + $0x8] sm:$0xff] %v802
        %827 = vst.msk [vmem:[%s189 + $0x10] sm:$0xff] %vm320, %v803
        %828 = vst [vmem:[%s189 + $0x18] sm:$0xff] %v804
        %829 = vst [vmem:[%s189 + $0x20] sm:$0xff] %v805
        %830 = vst.msk [vmem:[%s189 + $0x28] sm:$0xff] %vm320, %v806
        %831 = vst [vmem:[%s189 + $0x30] sm:$0xff] %v807
        %832 = vst [vmem:[%s189 + $0x38] sm:$0xff] %v808
        %833 = vst.msk [vmem:[%s189 + $0x40] sm:$0xff] %vm320, %v809
        %834 = vst [vmem:[%s189 + $0x48] sm:$0xff] %v810
        %835 = vst [vmem:[%s189 + $0x50] sm:$0xff] %v811
        %836 = vst.msk [vmem:[%s189 + $0x58] sm:$0xff] %vm320, %v812
        %837 = vst [vmem:[%s189 + $0x60] sm:$0xff] %v813
        %838 = vst [vmem:[%s189 + $0x68] sm:$0xff] %v814
        %839 = vst.msk [vmem:[%s189 + $0x70] sm:$0xff] %vm320, %v815
        %840 = vst [vmem:[%s189 + $0x78] sm:$0xff] %v816
        %841 = vst [vmem:[%s189 + $0x80] sm:$0xff] %v817
        %842 = vst.msk [vmem:[%s189 + $0x88] sm:$0xff] %vm320, %v818
        %843 = vst [vmem:[%s189 + $0x90] sm:$0xff] %v819
        %844 = vst [vmem:[%s189 + $0x98] sm:$0xff] %v820
        %845 = vst.msk [vmem:[%s189 + $0xa0] sm:$0xff] %vm320, %v821
        %846 = vst [vmem:[%s189 + $0xa8] sm:$0xff] %v822
        %847 = vst [vmem:[%s189 + $0xb0] sm:$0xff] %v823
        %848 = vst.msk [vmem:[%s189 + $0xb8] sm:$0xff] %vm320, %v824
        %s849 = smul.u32 8, %s15
        %p850 = scmp.lt.s32.totalorder %s849, 15
        %s851 = scalar_select %p850, %s849, 15
        %s852 = smul.addr %s851, 3
        %s853 = smul.addr %s852, 8
        %s854 = scalar_lea.vmem %s3, %s853
        // Predicated region
        $region37: #{tpu_custom_call.1} parent=31 // pred_check
          %p855 = pneg %p101
        $region38: #{tpu_custom_call.1} parent=31 // pred_check_branch
          %857 = sbr.rel (%p855) target = $region40
        $region39: #{tpu_custom_call.1} parent=31 // pred_region
          %s858 = smul.u32 8, %s15
        $region40: #{tpu_custom_call.1} parent=31 // pred_fallthru
          _
      $region32: #{tpu_custom_call.1} parent=5 // pred_fallthru
        _
      %p859 = scmp.le.s32.totalorder 2, %s10
      // Predicated region
      $region41: #{tpu_custom_call.1} parent=5 // pred_check
        %p860 = pneg %p859
      $region42: #{tpu_custom_call.1} parent=5 // pred_check_branch
        %862 = sbr.rel (%p860) target = $region44
      $region43: #{tpu_custom_call.1} parent=5 // pred_region
        %s863 = ssub.s32 %s10, 2
        // Predicated region
        $region45: #{tpu_custom_call.1} parent=43 // pred_check
          %p864 = pneg %p107
        $region46: #{tpu_custom_call.1} parent=43 // pred_check_branch
          %866 = sbr.rel (%p864) target = $region48
        $region47: #{tpu_custom_call.1} parent=43 // pred_region
          %s867 = smul.u32 8, %s16
          %p868 = scmp.lt.s32.totalorder %s867, 15
          %s869 = scalar_select %p868, %s867, 15
          %s870 = smul.addr %s869, 3
          %s871 = smul.addr %s870, 8
          %s872 = scalar_lea.vmem %s3, %s871
        $region48: #{tpu_custom_call.1} parent=43 // pred_fallthru
          _
      $region44: #{tpu_custom_call.1} parent=5 // pred_fallthru
        _
    $region6: #{tpu_custom_call.1} parent=1 // loop_footer
      %s14 = sadd.s32 1, %s10
    $region7: #{tpu_custom_call.1} parent=1 // loop_footer_branch
      %9 = sbr.rel target = $region3
    $region8: #{tpu_custom_call.1} parent=1 // loop_exit
      _
    %873 = vsyncpa [#allocation3], 1
    %s874 = scalar_lea.sflag [#allocation3], 1
    %875 = vsyncpa %s874, 1

</llo_original>
